<compile_context>
chip_gen: v7x
topology: tpu7x:2x2x1
jax: 0.10.0
libtpu: 0.0.40
codegen_flags: <defaults>
</compile_context>

<pallas_src>
import jax
import jax.numpy as jnp
from jax.experimental import pallas as pl
from jax.experimental.pallas import tpu as pltpu

_MIB = 1024 * 1024


def _glu_tile_kernel(a_ref, b_ref, o_ref):
    """Aligned fast path: a_ref / b_ref / o_ref are (1, 1, tr, L) VMEM tiles."""
    b = b_ref[...].astype(jnp.float32)
    # sigmoid(b) = 1 / (1 + exp(-b)); exact reciprocal keeps numerics within
    # the 1e-5 check (kernel is HBM-bound, so the VPU divide is hidden).
    sig = pl.reciprocal(1.0 + jnp.exp(-b))
    # Multiply in the I/O dtype (no f32 upcast of `a` -> fewer live vregs).
    o_ref[...] = a_ref[...] * sig.astype(o_ref.dtype)


def _glu_full_row_kernel(x_ref, o_ref):
    """Fallback for M % 128 != 0: x_ref is (1, 2, M), o_ref is (1, 1, M)."""
    x = x_ref[...]
    a = x[:, 0:1, :]
    b = x[:, 1:2, :].astype(jnp.float32)
    sig = pl.reciprocal(1.0 + jnp.exp(-b))
    o_ref[...] = a * sig.astype(o_ref.dtype)


def _pick_tile(dim, target, align):
    """Largest divisor of `dim` that is a multiple of `align` and <= target.

    Falls back to `dim` itself (a full-extent block dim is always legal)."""
    upper = min(target, dim)
    start = upper - (upper % align)
    for d in range(start, 0, -align):
        if dim % d == 0:
            return d
    return dim


def glu(x, *, block_bytes_target=2 * _MIB):
    """GLU over the channel axis (axis=1) of an NCHW tensor."""
    n, c, h, w = x.shape
    assert c % 2 == 0, "channels dont divide 2!"
    nc = c // 2
    m = nc * h * w                      # flattened length of each channel half
    itemsize = jnp.dtype(x.dtype).itemsize

    if m % 128 == 0:
        # ---- fast path: (N, 2, R, L) pure view; a/b split via index_maps ----
        lane = next(l for l in (1024, 512, 256, 128) if m % l == 0)
        rows = m // lane
        # Row (sublane) tile: multiple of the dtype's native sublane packing,
        # sized so one block is ~2 MiB, independent of batch N.
        align = max(8, 32 // itemsize)            # 8 f32, 16 bf16, 32 int8/fp8
        tr_target = max(1, block_bytes_target // (lane * itemsize))
        if n == 1 and rows >= 2 * align:
            # Keep >= 2 parallel blocks so both v7x TensorCores get work.
            tr_target = min(tr_target, rows // 2)
        tr = _pick_tile(rows, tr_target, align)

        block_bytes = tr * lane * itemsize
        grid = (n, rows // tr)

        x4 = x.reshape(n, 2, rows, lane)          # pure view of NCHW memory
        a_spec = pl.BlockSpec((1, 1, tr, lane), lambda i, j: (i, 0, j, 0))
        b_spec = pl.BlockSpec((1, 1, tr, lane), lambda i, j: (i, 1, j, 0))
        o_spec = pl.BlockSpec((1, 1, tr, lane), lambda i, j: (i, 0, j, 0))

        # 2 buffers x (2 inputs + 1 output) x block, plus headroom; capped at
        # 40 MiB for v7x's 64 MiB VMEM, raises v5e's 16 MiB scoped default.
        vmem_bytes = int(min(40 * _MIB, max(16 * _MIB, 10 * block_bytes)))

        out = pl.pallas_call(
            _glu_tile_kernel,
            out_shape=jax.ShapeDtypeStruct((n, 1, rows, lane), x.dtype),
            grid=grid,
            in_specs=[a_spec, b_spec],
            out_specs=o_spec,
            compiler_params=pltpu.CompilerParams(
                dimension_semantics=("parallel", "parallel"),
                vmem_limit_bytes=vmem_bytes),
        )(x4, x4)
    else:
        # ---- fallback: M not lane-aligned; single-pass full-row blocks ----
        # TODO(synk): tile the M axis with a masked tail store for very large
        # misaligned samples (the whole (2, M) row must currently fit in VMEM).
        m_pad = pl.cdiv(m, 128) * 128
        vmem_bytes = int(min(40 * _MIB, max(16 * _MIB, 32 * m_pad * itemsize)))
        x3 = x.reshape(n, 2, m)                   # pure view
        out = pl.pallas_call(
            _glu_full_row_kernel,
            out_shape=jax.ShapeDtypeStruct((n, 1, m), x.dtype),
            grid=(n,),
            in_specs=[pl.BlockSpec((1, 2, m), lambda i: (i, 0, 0))],
            out_specs=pl.BlockSpec((1, 1, m), lambda i: (i, 0, 0)),
            compiler_params=pltpu.CompilerParams(
                dimension_semantics=("parallel",),
                vmem_limit_bytes=vmem_bytes),
        )(x3)

    return out.reshape(n, nc, h, w)


def _reference(x):
    nc = x.shape[1] // 2
    return x[:, :nc] * jax.nn.sigmoid(x[:, nc:])


if __name__ == "__main__":
    key = jax.random.PRNGKey(0)

    # Main check: small NCHW input matching the module's contract.
    x = jax.random.normal(key, (2, 4, 16, 16), dtype=jnp.float32)
    y = jax.block_until_ready(glu(x))
    assert y.shape == (2, 2, 16, 16)
    assert jnp.allclose(y, _reference(x), atol=1e-5, rtol=1e-5)

    # Batch-1 check: exercises the N-independent tiling and the multi-block
    # M-axis grid (v7x dual-TensorCore path).
    x1 = jax.random.normal(jax.random.PRNGKey(1), (1, 8, 64, 64),
                           dtype=jnp.float32)
    y1 = jax.block_until_ready(glu(x1))
    assert y1.shape == (1, 4, 64, 64)
    assert jnp.allclose(y1, _reference(x1), atol=1e-5, rtol=1e-5)

    print("KERNEL_OK")
</pallas_src>

<mosaic_0001>
module attributes {stable_mosaic.version = 11 : i64} {
  func.func @_glu_tile_kernel(%arg0: i32, %arg1: i32, %arg2: memref<1x1x1x512xf32, #tpu.memory_space<vmem>>, %arg3: memref<1x1x1x512xf32, #tpu.memory_space<vmem>>, %arg4: memref<1x1x1x512xf32, #tpu.memory_space<vmem>>) attributes {dimension_semantics = [#tpu.dimension_semantics<parallel>, #tpu.dimension_semantics<parallel>], iteration_bounds = array<i64: 2, 1>, scalar_prefetch = 0 : i64, scratch_operands = 0 : i64, tpu.core_type = #tpu.core_type<tc>, window_params = [{transform_indices = @transform_0, window_bounds = array<i64: 1, 1, 1, 512>}, {transform_indices = @transform_1, window_bounds = array<i64: 1, 1, 1, 512>}, {transform_indices = @transform_2, window_bounds = array<i64: 1, 1, 1, 512>}]} {
    %c0 = arith.constant 0 : index
    %c0_0 = arith.constant 0 : index
    %c0_1 = arith.constant 0 : index
    %c0_2 = arith.constant 0 : index
    %0 = vector.load %arg3[%c0, %c0_0, %c0_1, %c0_2] : memref<1x1x1x512xf32, #tpu.memory_space<vmem>>, vector<1x1x1x512xf32>
    %cst = arith.constant 0.000000e+00 : f32
    %1 = vector.broadcast %cst : f32 to vector<1x1x1x512xf32>
    %2 = arith.subf %1, %0 : vector<1x1x1x512xf32>
    %3 = math.exp %2 : vector<1x1x1x512xf32>
    %cst_3 = arith.constant 1.000000e+00 : f32
    %4 = vector.broadcast %cst_3 : f32 to vector<1x1x1x512xf32>
    %5 = arith.addf %4, %3 : vector<1x1x1x512xf32>
    %6 = tpu.reciprocal %5 : vector<1x1x1x512xf32> -> vector<1x1x1x512xf32>
    %c0_4 = arith.constant 0 : index
    %c0_5 = arith.constant 0 : index
    %c0_6 = arith.constant 0 : index
    %c0_7 = arith.constant 0 : index
    %7 = vector.load %arg2[%c0_4, %c0_5, %c0_6, %c0_7] : memref<1x1x1x512xf32, #tpu.memory_space<vmem>>, vector<1x1x1x512xf32>
    %8 = arith.mulf %7, %6 : vector<1x1x1x512xf32>
    %c0_8 = arith.constant 0 : index
    %c0_9 = arith.constant 0 : index
    %c0_10 = arith.constant 0 : index
    %c0_11 = arith.constant 0 : index
    %9 = vector.load %arg4[%c0_8, %c0_9, %c0_10, %c0_11] : memref<1x1x1x512xf32, #tpu.memory_space<vmem>>, vector<1x1x1x512xf32>
    tpu.vector_store %arg4[%c0_8, %c0_9, %c0_10, %c0_11], %8 {strides = array<i32>} : memref<1x1x1x512xf32, #tpu.memory_space<vmem>>, vector<1x1x1x512xf32>,
    return
  }
  func.func @transform_0(%arg0: i32, %arg1: i32) -> (i32, i32, i32, i32) {
    %c0_i32 = arith.constant 0 : i32
    %c0_i32_0 = arith.constant 0 : i32
    %c0_i32_1 = arith.constant 0 : i32
    return %arg0, %c0_i32, %arg1, %c0_i32_0 : i32, i32, i32, i32
  }
  func.func @transform_1(%arg0: i32, %arg1: i32) -> (i32, i32, i32, i32) {
    %c1_i32 = arith.constant 1 : i32
    %c0_i32 = arith.constant 0 : i32
    %c0_i32_0 = arith.constant 0 : i32
    return %arg0, %c1_i32, %arg1, %c0_i32 : i32, i32, i32, i32
  }
  func.func @transform_2(%arg0: i32, %arg1: i32) -> (i32, i32, i32, i32) {
    %c0_i32 = arith.constant 0 : i32
    %c0_i32_0 = arith.constant 0 : i32
    %c0_i32_1 = arith.constant 0 : i32
    return %arg0, %c0_i32, %arg1, %c0_i32_0 : i32, i32, i32, i32
  }
}

</mosaic_0001>

<llo_original>
// kernel: tpu_custom_call.1
$region0: #{tpu_custom_call.1}
  #allocation0 [shape = 'u32[]', space=smem, size = 0x4, offset = 0x4, fixed_abs, tag = 'smem constant byte address 0x4 - core index']
  #allocation1 [shape = 'u32[144,128]{1,0:T(1,128)}', space=vmem, size = 0x12000, scoped, tag = 'internal scratch']
  %s0 = inlined_call_operand.hbm [shape: f32[2,2,1,512], index: 0, kind: input, shape index: {}]
  %s1 = inlined_call_operand.hbm [shape: f32[2,2,1,512], index: 1, kind: input, shape index: {}]
  %s2 = inlined_call_operand.hbm [shape: f32[2,1,1,512], index: 2, kind: output, shape index: {}]
  %s3 = sld [smem:[#allocation0]]
  $region49: #{tpu_custom_call.1} parent=0
    _
  %s5 = ssub.s32 1, %s3
  %s6 = scalar_select 0, %s5, %s3
  $region1: #{tpu_custom_call.1} parent=0
    #allocation2 [shape = 'u8[4096]{0}', space=vmem, size = 0x1000, scoped, tag = 'input window, operand 0']
    #allocation3 [shape = 's32[2]{0}', space=sflag, size = 0x8, scoped, tag = 'scoped memory for tpu_custom_call.1']
    #allocation4 [shape = 's32[2]{0}', space=sflag, size = 0x8, scoped, tag = 'scoped memory for tpu_custom_call.1']
    #allocation5 [shape = 'u8[4096]{0}', space=vmem, size = 0x1000, scoped, tag = 'input window, operand 1']
    #allocation6 [shape = 's32[2]{0}', space=sflag, size = 0x8, scoped, tag = 'scoped memory for tpu_custom_call.1']
    #allocation7 [shape = 'u8[4096]{0}', space=vmem, size = 0x1000, scoped, tag = 'output window, operand 0']
    %7 = vsyncpa [#allocation3], 0
    %s8 = scalar_lea.sflag [#allocation3], 1
    %9 = vsyncpa %s8, 0
    %10 = vsyncpa [#allocation6], 0
    %s11 = scalar_lea.sflag [#allocation6], 1
    %12 = vsyncpa %s11, 0
    %13 = vsyncpa [#allocation4], 0
    %s14 = scalar_lea.sflag [#allocation4], 1
    %15 = vsyncpa %s14, 0
    loop: start=0, step=1, limit=4
    $region2: #{tpu_custom_call.1} parent=1 // loop_pre_header
      _
    $region3: #{tpu_custom_call.1} parent=1 // loop_header
      %s17 = sphi 0, %s21
      %p18 = scmp.ge.s32.totalorder %s17, 4
      %s24 = sphi 0, %s36
      %s25 = sphi 0, %s32
      %s26 = sphi 0, %s24
      %s27 = sphi 0, %s25
      %s28 = sphi 0, %s26
      %s29 = sphi 0, %s27
      %s41 = sphi 0, %s43
      %s44 = sphi 0, %s41
      %s45 = sphi 0, %s44
      %s61 = sphi 0, %s45
      %s69 = sphi 0, %s71
      %s72 = sphi 0, %s69
      %s73 = sphi 0, %s72
      %s89 = sphi 0, %s73
      %s97 = sphi 0, %s99
      %s100 = sphi 0, %s97
      %s101 = sphi 0, %s100
      %s117 = sphi 0, %s101
    $region4: #{tpu_custom_call.1} parent=1 // loop_header_branch
      %20 = sbr.rel (%p18) target = $region8
    $region5: #{tpu_custom_call.1} parent=1 // loop_body
      %s22 = ssub.s32 %s17, 1
      %s23 = ssub.s32 %s17, 2
      %s30 = sadd.s32 1, %s25
      %p31 = scmp.ge.s32.totalorder %s30, 1
      %s32 = scalar_select %p31, 0, %s30
      %s33 = sadd.s32 1, %s24
      %s34 = scalar_select %p31, %s33, %s24
      %p35 = scmp.ge.s32.totalorder %s34, 2
      %s36 = scalar_select %p35, 0, %s34
      %s37 = ssub.s32 %s24, %s36
      %s38 = ssub.s32 %s25, %s32
      %s39 = sor.u32 %s37, %s38
      %p40 = scmp.eq.s32.totalorder %s39, 0
      %s42 = sadd.s32 %s41, 1
      %s43 = scalar_select %p40, %s41, %s42
      %p46 = pneg %p40
      %p47 = scmp.eq.s32.totalorder %s17, 1
      %p48 = por %p46, %p47
      %p49 = scmp.ne.s32.totalorder %s41, %s44
      %p50 = scmp.eq.s32.totalorder %s17, 0
      %p51 = por %p49, %p50
      %p52 = scmp.ne.s32.totalorder %s41, %s44
      %p53 = scmp.eq.s32.totalorder %s22, 1
      %p54 = por %p52, %p53
      %p55 = scmp.ne.s32.totalorder %s44, %s45
      %p56 = scmp.eq.s32.totalorder %s22, 0
      %p57 = por %p55, %p56
      %p58 = scmp.ne.s32.totalorder %s44, %s45
      %p59 = scmp.eq.s32.totalorder %s23, 1
      %p60 = por %p58, %p59
      %p62 = scmp.ne.s32.totalorder %s45, %s61
      %p63 = scmp.eq.s32.totalorder %s23, 0
      %p64 = por %p62, %p63
      %s65 = ssub.s32 %s24, %s36
      %s66 = ssub.s32 %s25, %s32
      %s67 = sor.u32 %s65, %s66
      %p68 = scmp.eq.s32.totalorder %s67, 0
      %s70 = sadd.s32 %s69, 1
      %s71 = scalar_select %p68, %s69, %s70
      %p74 = pneg %p68
      %p75 = scmp.eq.s32.totalorder %s17, 1
      %p76 = por %p74, %p75
      %p77 = scmp.ne.s32.totalorder %s69, %s72
      %p78 = scmp.eq.s32.totalorder %s17, 0
      %p79 = por %p77, %p78
      %p80 = scmp.ne.s32.totalorder %s69, %s72
      %p81 = scmp.eq.s32.totalorder %s22, 1
      %p82 = por %p80, %p81
      %p83 = scmp.ne.s32.totalorder %s72, %s73
      %p84 = scmp.eq.s32.totalorder %s22, 0
      %p85 = por %p83, %p84
      %p86 = scmp.ne.s32.totalorder %s72, %s73
      %p87 = scmp.eq.s32.totalorder %s23, 1
      %p88 = por %p86, %p87
      %p90 = scmp.ne.s32.totalorder %s73, %s89
      %p91 = scmp.eq.s32.totalorder %s23, 0
      %p92 = por %p90, %p91
      %s93 = ssub.s32 %s24, %s36
      %s94 = ssub.s32 %s25, %s32
      %s95 = sor.u32 %s93, %s94
      %p96 = scmp.eq.s32.totalorder %s95, 0
      %s98 = sadd.s32 %s97, 1
      %s99 = scalar_select %p96, %s97, %s98
      %p102 = pneg %p96
      %p103 = scmp.eq.s32.totalorder %s17, 1
      %p104 = por %p102, %p103
      %p105 = scmp.ne.s32.totalorder %s97, %s100
      %p106 = scmp.eq.s32.totalorder %s17, 0
      %p107 = por %p105, %p106
      %p108 = scmp.ne.s32.totalorder %s97, %s100
      %p109 = scmp.eq.s32.totalorder %s22, 1
      %p110 = por %p108, %p109
      %p111 = scmp.ne.s32.totalorder %s100, %s101
      %p112 = scmp.eq.s32.totalorder %s22, 0
      %p113 = por %p111, %p112
      %p114 = scmp.ne.s32.totalorder %s100, %s101
      %p115 = scmp.eq.s32.totalorder %s23, 1
      %p116 = por %p114, %p115
      %p118 = scmp.ne.s32.totalorder %s101, %s117
      %p119 = scmp.eq.s32.totalorder %s23, 0
      %p120 = por %p118, %p119
      %p121 = scmp.le.s32.totalorder 1, %s17
      %p122 = scmp.lt.s32.totalorder %s17, 3
      %p123 = pnand %p121, %p122
      %p124 = pneg %p123
      // Predicated region
      $region9: #{tpu_custom_call.1} parent=5 // pred_check
        _
      $region10: #{tpu_custom_call.1} parent=5 // pred_check_branch
        %126 = sbr.rel (%p123) target = $region12
      $region11: #{tpu_custom_call.1} parent=5 // pred_region
        %s127 = ssub.s32 %s17, 1
      $region12: #{tpu_custom_call.1} parent=5 // pred_fallthru
        _
      %p128 = scmp.lt.s32.totalorder %s17, 2
      // Predicated region
      $region13: #{tpu_custom_call.1} parent=5 // pred_check
        %p129 = pneg %p128
      $region14: #{tpu_custom_call.1} parent=5 // pred_check_branch
        %131 = sbr.rel (%p129) target = $region16
      $region15: #{tpu_custom_call.1} parent=5 // pred_region
        // Predicated region
        $region17: #{tpu_custom_call.1} parent=15 // pred_check
          %p132 = pneg %p51
        $region18: #{tpu_custom_call.1} parent=15 // pred_check_branch
          %134 = sbr.rel (%p132) target = $region20
        $region19: #{tpu_custom_call.1} parent=15 // pred_region
          %s135 = sand.u32 %s41, 1
          %s136 = scalar_lea.sflag [#allocation3], %s135
          %s137 = sand.u32 %s41, 1
          %s138 = smul.addr %s137, 4
          %s139 = scalar_lea.vmem [#allocation2], %s138
          %s141 = ssub.s32 64, 64
          %142 = vsyncadd %s136, %s141
          %s143 = smul.addr %s25, 4
          %s144 = smul.addr %s24, 8
          %s145 = sadd.s32 %s143, %s144
          %s146 = smul.addr %s145, 16
          %s147 = scalar_lea.hbm %s0, %s146
          %s149 = sshll.u32 %s139, 4
          %s150 = int_to_ptr.vmem [resolvable:$true] %s149
          %152 = dma.hbm_to_vmem [thread:$0]  %s147, 64, %s150, %s136
        $region20: #{tpu_custom_call.1} parent=15 // pred_fallthru
          _
        // Predicated region
        $region21: #{tpu_custom_call.1} parent=15 // pred_check
          %p153 = pneg %p79
        $region22: #{tpu_custom_call.1} parent=15 // pred_check_branch
          %155 = sbr.rel (%p153) target = $region24
        $region23: #{tpu_custom_call.1} parent=15 // pred_region
          %s156 = sand.u32 %s69, 1
          %s157 = scalar_lea.sflag [#allocation6], %s156
          %s158 = sand.u32 %s69, 1
          %s159 = smul.addr %s158, 4
          %s160 = scalar_lea.vmem [#allocation5], %s159
          %s162 = ssub.s32 64, 64
          %163 = vsyncadd %s157, %s162
          %s164 = smul.addr %s25, 4
          %s165 = sadd.s32 %s164, 4
          %s166 = smul.addr %s24, 8
          %s167 = sadd.s32 %s165, %s166
          %s168 = smul.addr %s167, 16
          %s169 = scalar_lea.hbm %s1, %s168
          %s171 = sshll.u32 %s160, 4
          %s172 = int_to_ptr.vmem [resolvable:$true] %s171
          %174 = dma.hbm_to_vmem [thread:$0]  %s169, 64, %s172, %s157
        $region24: #{tpu_custom_call.1} parent=15 // pred_fallthru
          _
      $region16: #{tpu_custom_call.1} parent=5 // pred_fallthru
        _
      %p175 = scmp.le.s32.totalorder 1, %s17
      %p176 = scmp.lt.s32.totalorder %s17, 3
      %p177 = pnand %p175, %p176
      %p178 = pneg %p177
      // Predicated region
      $region25: #{tpu_custom_call.1} parent=5 // pred_check
        _
      $region26: #{tpu_custom_call.1} parent=5 // pred_check_branch
        %180 = sbr.rel (%p177) target = $region28
      $region27: #{tpu_custom_call.1} parent=5 // pred_region
        %s181 = ssub.s32 %s17, 1
        %s182 = sand.u32 %s44, 1
        %s183 = scalar_lea.sflag [#allocation3], %s182
        %s184 = sand.u32 %s44, 1
        %s185 = smul.addr %s184, 4
        %s186 = scalar_lea.vmem [#allocation2], %s185
        // Predicated region
        $region29: #{tpu_custom_call.1} parent=27 // pred_check
          %p187 = pneg %p57
        $region30: #{tpu_custom_call.1} parent=27 // pred_check_branch
          %189 = sbr.rel (%p187) target = $region32
        $region31: #{tpu_custom_call.1} parent=27 // pred_region
          %190 = dma.done %s183, 64
        $region32: #{tpu_custom_call.1} parent=27 // pred_fallthru
          _
        %s191 = sand.u32 %s72, 1
        %s192 = scalar_lea.sflag [#allocation6], %s191
        %s193 = sand.u32 %s72, 1
        %s194 = smul.addr %s193, 4
        %s195 = scalar_lea.vmem [#allocation5], %s194
        // Predicated region
        $region33: #{tpu_custom_call.1} parent=27 // pred_check
          %p196 = pneg %p85
        $region34: #{tpu_custom_call.1} parent=27 // pred_check_branch
          %198 = sbr.rel (%p196) target = $region36
        $region35: #{tpu_custom_call.1} parent=27 // pred_region
          %199 = dma.done %s192, 64
        $region36: #{tpu_custom_call.1} parent=27 // pred_fallthru
          _
        %s200 = sand.u32 %s44, 1
        %s201 = scalar_lea.sflag [#allocation3], %s200
        %s202 = sand.u32 %s44, 1
        %s203 = smul.addr %s202, 4
        %s204 = scalar_lea.vmem [#allocation2], %s203
        %p205 = pneg %p57
        %p206 = pneg %p54
        %s207 = sand.u32 %s72, 1
        %s208 = scalar_lea.sflag [#allocation6], %s207
        %s209 = sand.u32 %s72, 1
        %s210 = smul.addr %s209, 4
        %s211 = scalar_lea.vmem [#allocation5], %s210
        %p212 = pneg %p85
        %p213 = pneg %p82
        %p214 = pneg %p113
        %p215 = pneg %p110
        %s216 = sand.u32 %s100, 1
        %s217 = scalar_lea.sflag [#allocation4], %s216
        %s218 = sand.u32 %s100, 1
        %s219 = smul.addr %s218, 4
        %s220 = scalar_lea.vmem [#allocation7], %s219
        %v221 = vld [vmem:[%s195] sm:$0xf]
        %v222 = vsub.f32 0.0, %v221
        %v223 = vmul.f32 %v222, 1.442695
        %v224 = vpow.pop %v223
        %v225 = vadd.f32 %v224, 1.0
        %v226 = vrcp.pop %v225
        %v227 = vld [vmem:[%s186] sm:$0xf]
        %v228 = vmul.f32 %v227, %v226
        %v229 = vlaneseq
        %vm230 = vcmp.ge.s32.totalorder %v229, 0
        %vm231 = vcmp.lt.s32.totalorder %v229, 512
        %vm232 = vmand %vm230, %vm231
        %233 = vst.msk [vmem:[%s220] sm:$0xf] %vm232, %v228
        %s234 = sand.u32 %s100, 1
        %s235 = scalar_lea.sflag [#allocation4], %s234
        %s236 = sand.u32 %s100, 1
        %s237 = smul.addr %s236, 4
        %s238 = scalar_lea.vmem [#allocation7], %s237
        // Predicated region
        $region37: #{tpu_custom_call.1} parent=27 // pred_check
          %p239 = pneg %p110
        $region38: #{tpu_custom_call.1} parent=27 // pred_check_branch
          %241 = sbr.rel (%p239) target = $region40
        $region39: #{tpu_custom_call.1} parent=27 // pred_region
          %s243 = ssub.s32 64, 64
          %244 = vsyncadd %s235, %s243
          %s245 = smul.addr %s27, 4
          %s246 = smul.addr %s26, 4
          %s247 = sadd.s32 %s245, %s246
          %s248 = smul.addr %s247, 16
          %s249 = scalar_lea.hbm %s2, %s248
          %s251 = sshll.u32 %s238, 4
          %s252 = int_to_ptr.vmem [resolvable:$true] %s251
          %254 = dma.vmem_to_hbm [thread:$0]  %s252, 64, %s249, %s235
        $region40: #{tpu_custom_call.1} parent=27 // pred_fallthru
          _
      $region28: #{tpu_custom_call.1} parent=5 // pred_fallthru
        _
      %p255 = scmp.le.s32.totalorder 2, %s17
      // Predicated region
      $region41: #{tpu_custom_call.1} parent=5 // pred_check
        %p256 = pneg %p255
      $region42: #{tpu_custom_call.1} parent=5 // pred_check_branch
        %258 = sbr.rel (%p256) target = $region44
      $region43: #{tpu_custom_call.1} parent=5 // pred_region
        %s259 = ssub.s32 %s17, 2
        // Predicated region
        $region45: #{tpu_custom_call.1} parent=43 // pred_check
          %p260 = pneg %p116
        $region46: #{tpu_custom_call.1} parent=43 // pred_check_branch
          %262 = sbr.rel (%p260) target = $region48
        $region47: #{tpu_custom_call.1} parent=43 // pred_region
          %s263 = sand.u32 %s101, 1
          %s264 = scalar_lea.sflag [#allocation4], %s263
          %s265 = sand.u32 %s101, 1
          %s266 = smul.addr %s265, 4
          %s267 = scalar_lea.vmem [#allocation7], %s266
          %268 = dma.done %s264, 64
        $region48: #{tpu_custom_call.1} parent=43 // pred_fallthru
          _
      $region44: #{tpu_custom_call.1} parent=5 // pred_fallthru
        _
    $region6: #{tpu_custom_call.1} parent=1 // loop_footer
      %s21 = sadd.s32 1, %s17
    $region7: #{tpu_custom_call.1} parent=1 // loop_footer_branch
      %16 = sbr.rel target = $region3
    $region8: #{tpu_custom_call.1} parent=1 // loop_exit
      _
    %269 = vsyncpa [#allocation3], 1
    %s270 = scalar_lea.sflag [#allocation3], 1
    %271 = vsyncpa %s270, 1
    %272 = vsyncpa [#allocation6], 1
    %s273 = scalar_lea.sflag [#allocation6], 1
    %274 = vsyncpa %s273, 1
    %275 = vsyncpa [#allocation4], 1
    %s276 = scalar_lea.sflag [#allocation4], 1
    %277 = vsyncpa %s276, 1

</llo_original>
